<compile_context>
chip_gen: v7x
topology: tpu7x:2x2x1
jax: 0.10.0
libtpu: 0.0.40
codegen_flags: <defaults>
</compile_context>

<pallas_src>
import jax
import jax.numpy as jnp
from jax.experimental import pallas as pl
from jax.experimental.pallas import tpu as pltpu


def _net_kernel(x_ref, w_ref, b_ref, o_ref):
    # x_ref: (TB, D) f32 VMEM tile of the input batch
    # w_ref: (1, D)  f32 VMEM (PyTorch nn.Linear weight layout, lane-dense)
    # b_ref: (1, 1)  f32 SMEM scalar bias
    # o_ref: (TB, 1) f32 VMEM output tile
    x = x_ref[...]
    w = w_ref[...]
    # VPU elementwise multiply (broadcast (1,D) over (TB,D)) + XLU lane reduce.
    logits = jnp.sum(x * w, axis=-1, keepdims=True) + b_ref[0, 0]
    o_ref[...] = jax.nn.sigmoid(logits)
    # TODO(synk): output is (TB, 1) -> masked partial stores; could be made
    # lane-dense via an XLU transpose, but output bytes are 1/D of the traffic.


def net_forward(x, weight, bias, *, block_batch=1024):
    """x: (B, D) f32; weight: (1, D) f32 (PyTorch layout); bias: (1,) f32."""
    B, D = x.shape

    # Batch tile: multiple of 8 (sublane), capped so double-buffered tiles fit
    # default scoped VMEM on every generation (incl. v7x's 64 MiB physical).
    b_round8 = ((B + 7) // 8) * 8
    tb = min(block_batch, b_round8)
    b_pad = ((B + tb - 1) // tb) * tb
    if b_pad != B:
        x = jnp.pad(x, ((0, b_pad - B), (0, 0)))

    w = weight.reshape(1, D)   # keep lane-dense; no transpose
    b = bias.reshape(1, 1)

    grid = (b_pad // tb,)
    out = pl.pallas_call(
        _net_kernel,
        out_shape=jax.ShapeDtypeStruct((b_pad, 1), jnp.float32),
        grid_spec=pl.GridSpec(
            grid=grid,
            in_specs=[
                pl.BlockSpec((tb, D), lambda i: (i, 0)),          # x tiles
                pl.BlockSpec((1, D), lambda i: (0, 0)),           # weight (resident)
                pl.BlockSpec(memory_space=pltpu.MemorySpace.SMEM),  # bias scalar
            ],
            out_specs=pl.BlockSpec((tb, 1), lambda i: (i, 0)),
        ),
        compiler_params=pltpu.CompilerParams(
            dimension_semantics=("parallel",),
        ),
        cost_estimate=pl.CostEstimate(
            flops=2 * b_pad * D,
            transcendentals=b_pad,
            bytes_accessed=4 * (b_pad * D + D + b_pad + 1),
        ),
    )(x, w, b)
    return out[:B]


if __name__ == "__main__":
    # Shapes consistent with the module: input_size = 768, small batch.
    batch = 8
    input_size = 768

    key = jax.random.PRNGKey(0)
    kx, kw, kb = jax.random.split(key, 3)

    x = jax.random.normal(kx, (batch, input_size), dtype=jnp.float32)
    # Init mimicking nn.Linear's uniform(-1/sqrt(D), 1/sqrt(D))
    bound = 1.0 / (input_size ** 0.5)
    weight = jax.random.uniform(kw, (1, input_size), jnp.float32, -bound, bound)
    bias = jax.random.uniform(kb, (1,), jnp.float32, -bound, bound)

    out = net_forward(x, weight, bias)
    out = jax.block_until_ready(out)

    # Reference check in plain JAX
    ref = jax.nn.sigmoid(x @ weight.T + bias)
    assert out.shape == (batch, 1)
    assert jnp.allclose(out, ref, atol=1e-5), "mismatch vs reference"

    print("KERNEL_OK")
</pallas_src>

<mosaic_0001>
module attributes {stable_mosaic.version = 11 : i64} {
  func.func @_net_kernel(%arg0: i32, %arg1: memref<8x768xf32, #tpu.memory_space<vmem>>, %arg2: memref<1x768xf32, #tpu.memory_space<vmem>>, %arg3: memref<1x1xf32, #tpu.memory_space<smem>>, %arg4: memref<8x1xf32, #tpu.memory_space<vmem>>) attributes {dimension_semantics = [#tpu.dimension_semantics<parallel>], iteration_bounds = array<i64: 1>, scalar_prefetch = 0 : i64, scratch_operands = 0 : i64, tpu.core_type = #tpu.core_type<tc>, window_params = [{transform_indices = @transform_0, window_bounds = array<i64: 8, 768>}, {pipeline_mode = #tpu.pipeline_mode<synchronous>, transform_indices = @transform_1, window_bounds = array<i64: 1, 768>}, {transform_indices = @transform_2, window_bounds = array<i64: 1, 1>}, {transform_indices = @transform_3, window_bounds = array<i64: 8, 1>}]} {
    %c0 = arith.constant 0 : index
    %c0_0 = arith.constant 0 : index
    %0 = vector.load %arg1[%c0, %c0_0] : memref<8x768xf32, #tpu.memory_space<vmem>>, vector<8x768xf32>
    %c0_1 = arith.constant 0 : index
    %c0_2 = arith.constant 0 : index
    %1 = vector.load %arg2[%c0_1, %c0_2] : memref<1x768xf32, #tpu.memory_space<vmem>>, vector<1x768xf32>
    %2 = vector.broadcast %1 : vector<1x768xf32> to vector<8x768xf32>
    %3 = arith.mulf %0, %2 : vector<8x768xf32>
    %cst = arith.constant dense<0.000000e+00> : vector<8xf32>
    %4 = vector.multi_reduction <add>, %3, %cst [1] : vector<8x768xf32> to vector<8xf32>
    %5 = vector.shape_cast %4 : vector<8xf32> to vector<8x1xf32>
    %c0_3 = arith.constant 0 : index
    %c0_4 = arith.constant 0 : index
    %6 = memref.load %arg3[%c0_3, %c0_4] : memref<1x1xf32, #tpu.memory_space<smem>>
    %7 = vector.broadcast %6 : f32 to vector<8x1xf32>
    %8 = arith.addf %5, %7 : vector<8x1xf32>
    %9 = arith.negf %8 : vector<8x1xf32>
    %10 = math.exp %9 : vector<8x1xf32>
    %cst_5 = arith.constant 1.000000e+00 : f32
    %11 = vector.broadcast %cst_5 : f32 to vector<8x1xf32>
    %12 = arith.addf %11, %10 : vector<8x1xf32>
    %13 = arith.divf %11, %12 : vector<8x1xf32>
    %c0_6 = arith.constant 0 : index
    %c0_7 = arith.constant 0 : index
    %14 = vector.load %arg4[%c0_6, %c0_7] : memref<8x1xf32, #tpu.memory_space<vmem>>, vector<8x1xf32>
    tpu.vector_store %arg4[%c0_6, %c0_7], %13 {strides = array<i32>} : memref<8x1xf32, #tpu.memory_space<vmem>>, vector<8x1xf32>,
    return
  }
  func.func @transform_0(%arg0: i32) -> (i32, i32) {
    %c0_i32 = arith.constant 0 : i32
    %c0_i32_0 = arith.constant 0 : i32
    return %arg0, %c0_i32 : i32, i32
  }
  func.func @transform_1(%arg0: i32) -> (i32, i32) {
    %c0_i32 = arith.constant 0 : i32
    %c0_i32_0 = arith.constant 0 : i32
    %c0_i32_1 = arith.constant 0 : i32
    return %c0_i32, %c0_i32_0 : i32, i32
  }
  func.func @transform_2(%arg0: i32) -> (i32, i32) {
    %c0_i32 = arith.constant 0 : i32
    %c0_i32_0 = arith.constant 0 : i32
    %c0_i32_1 = arith.constant 0 : i32
    return %c0_i32, %c0_i32_0 : i32, i32
  }
  func.func @transform_3(%arg0: i32) -> (i32, i32) {
    %c0_i32 = arith.constant 0 : i32
    %c0_i32_0 = arith.constant 0 : i32
    return %arg0, %c0_i32 : i32, i32
  }
}

</mosaic_0001>

<llo_original>
// kernel: tpu_custom_call.1
$region0: #{tpu_custom_call.1}
  #allocation0 [shape = 'u32[]', space=smem, size = 0x4, offset = 0x4, fixed_abs, tag = 'smem constant byte address 0x4 - core index']
  #allocation1 [shape = 'u32[144,128]{1,0:T(1,128)}', space=vmem, size = 0x12000, scoped, tag = 'internal scratch']
  #allocation2 [shape = 'f32[1,1]{1,0:T(1,128)S(6)}', space=smem, size = 0x200, scoped, tag = 'scoped memory for tpu_custom_call.1']
  %s0 = inlined_call_operand.hbm [shape: f32[8,768], index: 0, kind: input, shape index: {}]
  %s1 = inlined_call_operand.vmem [shape: f32[1,768], index: 1, kind: input, shape index: {}]
  %s2 = inlined_call_operand.<no memory space> [shape: f32[1,1], index: 2, kind: input, shape index: {}]
  %s3 = inlined_call_operand.vmem [shape: f32[8,1], index: 3, kind: output, shape index: {}]
  %s4 = sld [smem:[#allocation0]]
  $region26: #{tpu_custom_call.1} parent=0
    _
  %s6 = ssub.s32 1, %s4
  %s7 = scalar_select 0, %s6, %s4
  %8 = sst [smem:[#allocation2]] %s2
  $region1: #{tpu_custom_call.1} parent=0
    #allocation3 [shape = 'u8[24576]{0}', space=vmem, size = 0x6000, scoped, tag = 'input window, operand 0, single buffered']
    #allocation4 [shape = 's32[1]{0}', space=sflag, size = 0x4, scoped, tag = 'scoped memory for tpu_custom_call.1']
    %9 = vsyncpa [#allocation4], 0
    // Predicated region
    $region2: #{tpu_custom_call.1} parent=1 // pred_check
      _
    $region3: #{tpu_custom_call.1} parent=1 // pred_check_branch
      %11 = sbr.rel (0) target = $region5
    $region4: #{tpu_custom_call.1} parent=1 // pred_region
      %s13 = ssub.s32 768, 768
      %14 = vsyncadd [#allocation4], %s13
      %s16 = sshll.u32 [#allocation3], 4
      %s17 = int_to_ptr.vmem [resolvable:$true] %s16
      %19 = dma.hbm_to_vmem [thread:$0]  %s0, 768, %s17, [#allocation4]
    $region5: #{tpu_custom_call.1} parent=1 // pred_fallthru
      _
    // Predicated region
    $region6: #{tpu_custom_call.1} parent=1 // pred_check
      _
    $region7: #{tpu_custom_call.1} parent=1 // pred_check_branch
      %21 = sbr.rel (0) target = $region9
    $region8: #{tpu_custom_call.1} parent=1 // pred_region
      _
    $region9: #{tpu_custom_call.1} parent=1 // pred_fallthru
      _
    // Predicated region
    $region10: #{tpu_custom_call.1} parent=1 // pred_check
      _
    $region11: #{tpu_custom_call.1} parent=1 // pred_check_branch
      %23 = sbr.rel (0) target = $region13
    $region12: #{tpu_custom_call.1} parent=1 // pred_region
      _
    $region13: #{tpu_custom_call.1} parent=1 // pred_fallthru
      _
    // Predicated region
    $region14: #{tpu_custom_call.1} parent=1 // pred_check
      _
    $region15: #{tpu_custom_call.1} parent=1 // pred_check_branch
      %25 = sbr.rel (0) target = $region17
    $region16: #{tpu_custom_call.1} parent=1 // pred_region
      %26 = dma.done [#allocation4], 768
    $region17: #{tpu_custom_call.1} parent=1 // pred_fallthru
      _
    %v27 = vld [vmem:[#allocation3] sm:$0xff]
    %v28 = vld [vmem:[#allocation3 + $0x8] sm:$0xff]
    %v29 = vld [vmem:[#allocation3 + $0x10] sm:$0xff]
    %v30 = vld [vmem:[#allocation3 + $0x18] sm:$0xff]
    %v31 = vld [vmem:[#allocation3 + $0x20] sm:$0xff]
    %v32 = vld [vmem:[#allocation3 + $0x28] sm:$0xff]
    %v33 = vld [vmem:[%s1] sm:$0x3f]
    %v35 = vlaneseq
    %v36 = vshrl.u32 %v35, 7
    %v37 = vsub.s32 0, %v36
    %v38 = vrot.slane %v33, %v37
    %v39 = vlaneseq
    %v40 = vshrl.u32 %v39, 7
    %v41 = vsub.s32 1, %v40
    %v42 = vrot.slane %v33, %v41
    %v43 = vlaneseq
    %v44 = vshrl.u32 %v43, 7
    %v45 = vsub.s32 2, %v44
    %v46 = vrot.slane %v33, %v45
    %v47 = vlaneseq
    %v48 = vshrl.u32 %v47, 7
    %v49 = vsub.s32 3, %v48
    %v50 = vrot.slane %v33, %v49
    %v51 = vlaneseq
    %v52 = vshrl.u32 %v51, 7
    %v53 = vsub.s32 4, %v52
    %v54 = vrot.slane %v33, %v53
    %v55 = vlaneseq
    %v56 = vshrl.u32 %v55, 7
    %v57 = vsub.s32 5, %v56
    %v58 = vrot.slane %v33, %v57
    %v65 = vmul.f32 %v27, %v38
    %v66 = vmul.f32 %v28, %v42
    %v67 = vmul.f32 %v29, %v46
    %v68 = vmul.f32 %v30, %v50
    %v69 = vmul.f32 %v31, %v54
    %v70 = vmul.f32 %v32, %v58
    %v71 = vadd.f32 %v65, %v66
    %v72 = vadd.f32 %v71, %v67
    %v73 = vadd.f32 %v72, %v68
    %v74 = vadd.f32 %v73, %v69
    %v75 = vadd.f32 %v74, %v70
    %76 = vadd.xlane.f32.xlu0 %v75
    %v77 = vpop.xlane.xlu0 %76
    %s78 = sld [smem:[#allocation2]]
    %v79 = vstv %s78
    %v80 = vadd.f32 %v77, %v79
    %v81 = vxor.u32 %v80, 2147483648
    %v82 = vmul.f32 %v81, 1.442695
    %v83 = vpow.pop %v82
    %v84 = vadd.f32 %v83, 1.0
    %v85 = vrcp.pop %v84
    %v86 = vmul.f32 1.0, %v85
    %vm87 = vcmask 7168
    %88 = vst.msk [vmem:[%s3] sm:$0xff] %vm87, %v86
    // Predicated region
    $region18: #{tpu_custom_call.1} parent=1 // pred_check
      _
    $region19: #{tpu_custom_call.1} parent=1 // pred_check_branch
      %90 = sbr.rel (0) target = $region21
    $region20: #{tpu_custom_call.1} parent=1 // pred_region
      _
    $region21: #{tpu_custom_call.1} parent=1 // pred_fallthru
      _
    // Predicated region
    $region22: #{tpu_custom_call.1} parent=1 // pred_check
      _
    $region23: #{tpu_custom_call.1} parent=1 // pred_check_branch
      %92 = sbr.rel (0) target = $region25
    $region24: #{tpu_custom_call.1} parent=1 // pred_region
      _
    $region25: #{tpu_custom_call.1} parent=1 // pred_fallthru
      _
    %93 = vsyncpa [#allocation4], 1

</llo_original>
